<compile_context>
chip_gen: v7x
topology: tpu7x:2x2x1
jax: 0.10.0
libtpu: 0.0.40
codegen_flags: <defaults>
</compile_context>

<pallas_src>
import functools

import jax
import jax.numpy as jnp
from jax.experimental import pallas as pl
from jax.experimental.pallas import tpu as pltpu

EPS = 1e-5  # nn.InstanceNorm2d default eps


def _stats_kernel(x_ref, w_ref, stats_ref, acc_sum, acc_sq, *, hw_total):
    # x_ref:     (1, Cin, Thw)   one HW tile of one batch element
    # w_ref:     (Cout, Cin)     1x1 conv weight
    # stats_ref: (1, Cout, 2)    per-(n, channel) [mean, rstd]
    # acc_sum/acc_sq: (Cout, 1)  VMEM accumulators, persist across the T axis
    t = pl.program_id(1)

    @pl.when(t == 0)
    def _():
        acc_sum[...] = jnp.zeros_like(acc_sum)
        acc_sq[...] = jnp.zeros_like(acc_sq)

    x = x_ref[0].astype(jnp.float32)                        # (Cin, Thw)
    w = w_ref[...].astype(jnp.float32)                      # (Cout, Cin)
    y = jnp.dot(w, x, preferred_element_type=jnp.float32)   # (Cout, Thw)

    acc_sum[...] += jnp.sum(y, axis=-1, keepdims=True)       # (Cout, 1)
    acc_sq[...] += jnp.sum(y * y, axis=-1, keepdims=True)    # (Cout, 1)

    @pl.when(t == pl.num_programs(1) - 1)
    def _():
        inv_hw = 1.0 / float(hw_total)
        mean = acc_sum[...] * inv_hw
        var = acc_sq[...] * inv_hw - mean * mean             # biased variance
        var = jnp.maximum(var, 0.0)
        rstd = jax.lax.rsqrt(var + EPS)
        stats_ref[0, :, 0:1] = mean
        stats_ref[0, :, 1:2] = rstd


def _apply_kernel(x_ref, w_ref, stats_ref, o_ref):
    # x_ref:     (1, Cin, Thw)
    # w_ref:     (Cout, Cin)
    # stats_ref: (1, Cout, 2)   [mean, rstd] for this batch element
    # o_ref:     (1, Cout, Thw) lane-dense output tile
    x = x_ref[0].astype(jnp.float32)                         # (Cin, Thw)
    w = w_ref[...].astype(jnp.float32)                       # (Cout, Cin)
    y = jnp.dot(w, x, preferred_element_type=jnp.float32)    # (Cout, Thw)
    mean = stats_ref[0, :, 0:1]                              # (Cout, 1)
    rstd = stats_ref[0, :, 1:2]                              # (Cout, 1)
    o_ref[0] = jnp.maximum((y - mean) * rstd, 0.0).astype(o_ref.dtype)


def _choose_hw_tile(hw, cap):
    """Largest HW tile that is either the full axis or a multiple of 128 dividing
    hw exactly (so the stats accumulation never sees padded lanes)."""
    if hw <= cap:
        return hw
    t = (cap // 128) * 128
    while t >= 128:
        if hw % t == 0:
            return t
        t -= 128
    return hw  # no aligned divisor; fall back to a single full tile


def conv_block(x_nchw, weight, bias=None, *, tile_hw=4096):
    """Forward pass of Conv(in_ch, out_ch) with module defaults k=1, s=1, p=0,
    activation='relu', norm='instance'.

    x_nchw: (N, Cin, H, W)
    weight: (Cout, Cin) or (Cout, Cin, 1, 1)  1x1 conv kernel
    bias:   (Cout,) or None -- accepted for API parity but unused: the per-channel
            bias is exactly cancelled by InstanceNorm2d(affine=False).
    returns (N, Cout, H, W) in x's dtype.
    """
    # TODO(synk): only the module defaults (k=1, s=1, p=0) are implemented; a
    # general k>1 spatial conv would need an im2col / halo kernel.
    del bias
    N, Cin, H, W = x_nchw.shape
    w = weight.reshape(weight.shape[0], -1)
    Cout = w.shape[0]
    HW = H * W
    thw = _choose_hw_tile(HW, tile_hw)
    T = HW // thw

    x = x_nchw.reshape(N, Cin, HW)  # no transpose: channels->sublanes, HW->lanes

    # Pass 1: per-(batch, channel) mean / rstd over the spatial axis.
    stats = pl.pallas_call(
        functools.partial(_stats_kernel, hw_total=HW),
        out_shape=jax.ShapeDtypeStruct((N, Cout, 2), jnp.float32),
        grid_spec=pltpu.PrefetchScalarGridSpec(
            num_scalar_prefetch=0,
            grid=(N, T),
            in_specs=[
                pl.BlockSpec((1, Cin, thw), lambda n, t: (n, 0, t)),
                pl.BlockSpec((Cout, Cin), lambda n, t: (0, 0)),
            ],
            out_specs=pl.BlockSpec((1, Cout, 2), lambda n, t: (n, 0, 0)),
            scratch_shapes=[
                pltpu.VMEM((Cout, 1), jnp.float32),
                pltpu.VMEM((Cout, 1), jnp.float32),
            ],
        ),
        compiler_params=pltpu.CompilerParams(
            dimension_semantics=("parallel", "arbitrary")),
    )(x, w)

    # Pass 2: recompute y per tile, normalize, ReLU, lane-dense store.
    out = pl.pallas_call(
        _apply_kernel,
        out_shape=jax.ShapeDtypeStruct((N, Cout, HW), x_nchw.dtype),
        grid_spec=pltpu.PrefetchScalarGridSpec(
            num_scalar_prefetch=0,
            grid=(N, T),
            in_specs=[
                pl.BlockSpec((1, Cin, thw), lambda n, t: (n, 0, t)),
                pl.BlockSpec((Cout, Cin), lambda n, t: (0, 0)),
                pl.BlockSpec((1, Cout, 2), lambda n, t: (n, 0, 0)),
            ],
            out_specs=pl.BlockSpec((1, Cout, thw), lambda n, t: (n, 0, t)),
        ),
        compiler_params=pltpu.CompilerParams(
            dimension_semantics=("parallel", "parallel")),
    )(x, w, stats)

    return out.reshape(N, Cout, H, W)


def reference(x_nchw, weight, bias):
    # Pure-JAX reference of Conv2d(1x1, with bias) -> InstanceNorm2d -> ReLU.
    w = weight.reshape(weight.shape[0], -1)
    y = jnp.einsum('nchw,oc->nohw', x_nchw, w) + bias[None, :, None, None]
    mean = jnp.mean(y, axis=(2, 3), keepdims=True)
    var = jnp.mean((y - mean) ** 2, axis=(2, 3), keepdims=True)
    y = (y - mean) * jax.lax.rsqrt(var + EPS)
    return jnp.maximum(y, 0.0)


if __name__ == "__main__":
    key = jax.random.PRNGKey(0)
    k_x, k_w, k_b = jax.random.split(key, 3)

    N, Cin, H, W = 2, 4, 16, 16
    Cout = 8

    x = jax.random.normal(k_x, (N, Cin, H, W), dtype=jnp.float32)
    # Conv2d weight is (Cout, Cin, 1, 1); squeezed to (Cout, Cin).
    weight = jax.random.normal(k_w, (Cout, Cin), dtype=jnp.float32) * 0.1
    bias = jax.random.normal(k_b, (Cout,), dtype=jnp.float32) * 0.1

    # tile_hw=128 forces T = H*W/128 = 2 spatial tiles, exercising the
    # multi-tile accumulator / finalize path of the stats pass.
    out = conv_block(x, weight, bias, tile_hw=128)
    out = jax.block_until_ready(out)

    ref = reference(x, weight, bias)
    assert out.shape == (N, Cout, H, W)
    assert jnp.allclose(out, ref, atol=1e-4, rtol=1e-4), float(
        jnp.max(jnp.abs(out - ref)))

    print("KERNEL_OK")
</pallas_src>

<mosaic_0001>
module attributes {stable_mosaic.version = 11 : i64} {
  func.func @_stats_kernel(%arg0: i32, %arg1: i32, %arg2: memref<1x4x128xf32, #tpu.memory_space<vmem>>, %arg3: memref<8x4xf32, #tpu.memory_space<vmem>>, %arg4: memref<1x8x2xf32, #tpu.memory_space<vmem>>, %arg5: memref<8x1xf32, #tpu.memory_space<vmem>>, %arg6: memref<8x1xf32, #tpu.memory_space<vmem>>) attributes {dimension_semantics = [#tpu.dimension_semantics<parallel>, #tpu.dimension_semantics<arbitrary>], iteration_bounds = array<i64: 2, 2>, scalar_prefetch = 0 : i64, scratch_operands = 2 : i64, tpu.core_type = #tpu.core_type<tc>, window_params = [{transform_indices = @transform_0, window_bounds = array<i64: 1, 4, 128>}, {pipeline_mode = #tpu.pipeline_mode<synchronous>, transform_indices = @transform_1, window_bounds = array<i64: 8, 4>}, {transform_indices = @transform_2, window_bounds = array<i64: 1, 8, 2>}]} {
    %c0_i32 = arith.constant 0 : i32
    %0 = arith.cmpi eq, %arg1, %c0_i32 : i32
    %1 = arith.extui %0 : i1 to i32
    %c0_i32_0 = arith.constant 0 : i32
    %2 = arith.cmpi ne, %1, %c0_i32_0 : i32
    scf.if %2 {
      %cst_16 = arith.constant 0.000000e+00 : f32
      %21 = vector.broadcast %cst_16 : f32 to vector<8x1xf32>
      %c0_17 = arith.constant 0 : index
      %c0_18 = arith.constant 0 : index
      %22 = vector.load %arg5[%c0_17, %c0_18] : memref<8x1xf32, #tpu.memory_space<vmem>>, vector<8x1xf32>
      tpu.vector_store %arg5[%c0_17, %c0_18], %21 {strides = array<i32>} : memref<8x1xf32, #tpu.memory_space<vmem>>, vector<8x1xf32>,
      %cst_19 = arith.constant 0.000000e+00 : f32
      %23 = vector.broadcast %cst_19 : f32 to vector<8x1xf32>
      %c0_20 = arith.constant 0 : index
      %c0_21 = arith.constant 0 : index
      %24 = vector.load %arg6[%c0_20, %c0_21] : memref<8x1xf32, #tpu.memory_space<vmem>>, vector<8x1xf32>
      tpu.vector_store %arg6[%c0_20, %c0_21], %23 {strides = array<i32>} : memref<8x1xf32, #tpu.memory_space<vmem>>, vector<8x1xf32>,
    } else {
    }
    %c0 = arith.constant 0 : index
    %c0_1 = arith.constant 0 : index
    %c0_2 = arith.constant 0 : index
    %3 = vector.load %arg2[%c0, %c0_1, %c0_2] : memref<1x4x128xf32, #tpu.memory_space<vmem>>, vector<1x4x128xf32>
    %4 = vector.shape_cast %3 : vector<1x4x128xf32> to vector<4x128xf32>
    %c0_3 = arith.constant 0 : index
    %c0_4 = arith.constant 0 : index
    %5 = vector.load %arg3[%c0_3, %c0_4] : memref<8x4xf32, #tpu.memory_space<vmem>>, vector<8x4xf32>
    %cst = arith.constant dense<0.000000e+00> : vector<8x128xf32>
    %6 = tpu.matmul %5, %4, %cst {dimension_numbers = #tpu.dot_dimension_numbers<[1], [0], [0], [1], [0, 0, 1, 1], [], []>} : vector<8x4xf32>, vector<4x128xf32>, vector<8x128xf32> -> vector<8x128xf32>
    %c0_5 = arith.constant 0 : index
    %c0_6 = arith.constant 0 : index
    %7 = vector.load %arg5[%c0_5, %c0_6] : memref<8x1xf32, #tpu.memory_space<vmem>>, vector<8x1xf32>
    %cst_7 = arith.constant dense<0.000000e+00> : vector<8xf32>
    %8 = vector.multi_reduction <add>, %6, %cst_7 [1] : vector<8x128xf32> to vector<8xf32>
    %9 = vector.shape_cast %8 : vector<8xf32> to vector<8x1xf32>
    %10 = arith.addf %7, %9 : vector<8x1xf32>
    %c0_8 = arith.constant 0 : index
    %c0_9 = arith.constant 0 : index
    %11 = vector.load %arg5[%c0_8, %c0_9] : memref<8x1xf32, #tpu.memory_space<vmem>>, vector<8x1xf32>
    tpu.vector_store %arg5[%c0_8, %c0_9], %10 {strides = array<i32>} : memref<8x1xf32, #tpu.memory_space<vmem>>, vector<8x1xf32>,
    %c0_10 = arith.constant 0 : index
    %c0_11 = arith.constant 0 : index
    %12 = vector.load %arg6[%c0_10, %c0_11] : memref<8x1xf32, #tpu.memory_space<vmem>>, vector<8x1xf32>
    %13 = arith.mulf %6, %6 : vector<8x128xf32>
    %cst_12 = arith.constant dense<0.000000e+00> : vector<8xf32>
    %14 = vector.multi_reduction <add>, %13, %cst_12 [1] : vector<8x128xf32> to vector<8xf32>
    %15 = vector.shape_cast %14 : vector<8xf32> to vector<8x1xf32>
    %16 = arith.addf %12, %15 : vector<8x1xf32>
    %c0_13 = arith.constant 0 : index
    %c0_14 = arith.constant 0 : index
    %17 = vector.load %arg6[%c0_13, %c0_14] : memref<8x1xf32, #tpu.memory_space<vmem>>, vector<8x1xf32>
    tpu.vector_store %arg6[%c0_13, %c0_14], %16 {strides = array<i32>} : memref<8x1xf32, #tpu.memory_space<vmem>>, vector<8x1xf32>,
    %c1_i32 = arith.constant 1 : i32
    %18 = arith.cmpi eq, %arg1, %c1_i32 : i32
    %19 = arith.extui %18 : i1 to i32
    %c0_i32_15 = arith.constant 0 : i32
    %20 = arith.cmpi ne, %19, %c0_i32_15 : i32
    scf.if %20 {
      %c0_16 = arith.constant 0 : index
      %c0_17 = arith.constant 0 : index
      %21 = vector.load %arg5[%c0_16, %c0_17] : memref<8x1xf32, #tpu.memory_space<vmem>>, vector<8x1xf32>
      %cst_18 = arith.constant 3.906250e-03 : f32
      %22 = vector.broadcast %cst_18 : f32 to vector<8x1xf32>
      %23 = arith.mulf %21, %22 : vector<8x1xf32>
      %c0_19 = arith.constant 0 : index
      %c0_20 = arith.constant 0 : index
      %24 = vector.load %arg6[%c0_19, %c0_20] : memref<8x1xf32, #tpu.memory_space<vmem>>, vector<8x1xf32>
      %cst_21 = arith.constant 3.906250e-03 : f32
      %25 = vector.broadcast %cst_21 : f32 to vector<8x1xf32>
      %26 = arith.mulf %24, %25 : vector<8x1xf32>
      %27 = arith.mulf %23, %23 : vector<8x1xf32>
      %28 = arith.subf %26, %27 : vector<8x1xf32>
      %cst_22 = arith.constant 0.000000e+00 : f32
      %29 = vector.broadcast %cst_22 : f32 to vector<8x1xf32>
      %30 = arith.maximumf %28, %29 : vector<8x1xf32>
      %cst_23 = arith.constant 9.99999974E-6 : f32
      %31 = vector.broadcast %cst_23 : f32 to vector<8x1xf32>
      %32 = arith.addf %30, %31 : vector<8x1xf32>
      %33 = math.rsqrt %32 : vector<8x1xf32>
      %c0_24 = arith.constant 0 : index
      %c0_25 = arith.constant 0 : index
      %c0_26 = arith.constant 0 : index
      %34 = vector.load %arg4[%c0_24, %c0_25, %c0_26] : memref<1x8x2xf32, #tpu.memory_space<vmem>>, vector<1x8x1xf32>
      %35 = vector.shape_cast %34 : vector<1x8x1xf32> to vector<8x1xf32>
      %36 = vector.shape_cast %23 : vector<8x1xf32> to vector<1x8x1xf32>
      tpu.vector_store %arg4[%c0_24, %c0_25, %c0_26], %36 {strides = array<i32>} : memref<1x8x2xf32, #tpu.memory_space<vmem>>, vector<1x8x1xf32>,
      %c0_27 = arith.constant 0 : index
      %c0_28 = arith.constant 0 : index
      %c1 = arith.constant 1 : index
      %37 = vector.load %arg4[%c0_27, %c0_28, %c1] : memref<1x8x2xf32, #tpu.memory_space<vmem>>, vector<1x8x1xf32>
      %38 = vector.shape_cast %37 : vector<1x8x1xf32> to vector<8x1xf32>
      %39 = vector.shape_cast %33 : vector<8x1xf32> to vector<1x8x1xf32>
      tpu.vector_store %arg4[%c0_27, %c0_28, %c1], %39 {strides = array<i32>} : memref<1x8x2xf32, #tpu.memory_space<vmem>>, vector<1x8x1xf32>,
    } else {
    }
    return
  }
  func.func @transform_0(%arg0: i32, %arg1: i32) -> (i32, i32, i32) {
    %c0_i32 = arith.constant 0 : i32
    %c0_i32_0 = arith.constant 0 : i32
    return %arg0, %c0_i32, %arg1 : i32, i32, i32
  }
  func.func @transform_1(%arg0: i32, %arg1: i32) -> (i32, i32) {
    %c0_i32 = arith.constant 0 : i32
    %c0_i32_0 = arith.constant 0 : i32
    %c0_i32_1 = arith.constant 0 : i32
    return %c0_i32, %c0_i32_0 : i32, i32
  }
  func.func @transform_2(%arg0: i32, %arg1: i32) -> (i32, i32, i32) {
    %c0_i32 = arith.constant 0 : i32
    %c0_i32_0 = arith.constant 0 : i32
    %c0_i32_1 = arith.constant 0 : i32
    return %arg0, %c0_i32, %c0_i32_0 : i32, i32, i32
  }
}

</mosaic_0001>

<llo_original>
// kernel: tpu_custom_call.1
$region0: #{tpu_custom_call.1}
  #allocation0 [shape = 'u32[]', space=smem, size = 0x4, offset = 0x4, fixed_abs, tag = 'smem constant byte address 0x4 - core index']
  #allocation1 [shape = 'u32[144,128]{1,0:T(1,128)}', space=vmem, size = 0x12000, scoped, tag = 'internal scratch']
  #allocation2 [shape = 'f32[8,1]{1,0:T(8,128)}', space=vmem, size = 0x1000, scoped, tag = 'scratch operand']
  #allocation3 [shape = 'f32[8,1]{1,0:T(8,128)}', space=vmem, size = 0x1000, scoped, tag = 'scratch operand']
  %s0 = inlined_call_operand.hbm [shape: f32[2,4,256], index: 0, kind: input, shape index: {}]
  %s1 = inlined_call_operand.vmem [shape: f32[8,4], index: 1, kind: input, shape index: {}]
  %s2 = inlined_call_operand.vmem [shape: f32[2,8,2], index: 2, kind: output, shape index: {}]
  %s3 = sld [smem:[#allocation0]]
  $region53: #{tpu_custom_call.1} parent=0
    _
  %s5 = ssub.s32 1, %s3
  %s6 = scalar_select 0, %s5, %s3
  $region1: #{tpu_custom_call.1} parent=0
    #allocation4 [shape = 'u8[4096]{0}', space=vmem, size = 0x1000, scoped, tag = 'input window, operand 0']
    #allocation5 [shape = 's32[2]{0}', space=sflag, size = 0x8, scoped, tag = 'scoped memory for tpu_custom_call.1']
    %7 = vsyncpa [#allocation5], 0
    %s8 = scalar_lea.sflag [#allocation5], 1
    %9 = vsyncpa %s8, 0
    loop: start=0, step=1, limit=6
    $region2: #{tpu_custom_call.1} parent=1 // loop_pre_header
      _
    $region3: #{tpu_custom_call.1} parent=1 // loop_header
      %s11 = sphi 0, %s15
      %p12 = scmp.ge.s32.totalorder %s11, 6
      %s18 = sphi 0, %s30
      %s19 = sphi 0, %s26
      %s20 = sphi 0, %s18
      %s21 = sphi 0, %s19
      %s22 = sphi 0, %s20
      %s23 = sphi 0, %s21
      %s35 = sphi 0, %s37
      %s38 = sphi 0, %s35
      %s39 = sphi 0, %s38
      %s55 = sphi 0, %s39
      %s59 = sphi 0, %s59
      %s61 = sphi 0, %s59
      %s62 = sphi 0, %s61
      %s76 = sphi 0, %s62
      %s82 = sphi 0, %s84
      %s85 = sphi 0, %s82
      %s86 = sphi 0, %s85
      %s102 = sphi 0, %s86
    $region4: #{tpu_custom_call.1} parent=1 // loop_header_branch
      %14 = sbr.rel (%p12) target = $region8
    $region5: #{tpu_custom_call.1} parent=1 // loop_body
      %s16 = ssub.s32 %s11, 1
      %s17 = ssub.s32 %s11, 2
      %s24 = sadd.s32 1, %s19
      %p25 = scmp.ge.s32.totalorder %s24, 2
      %s26 = scalar_select %p25, 0, %s24
      %s27 = sadd.s32 1, %s18
      %s28 = scalar_select %p25, %s27, %s18
      %p29 = scmp.ge.s32.totalorder %s28, 2
      %s30 = scalar_select %p29, 0, %s28
      %s31 = ssub.s32 %s18, %s30
      %s32 = ssub.s32 %s19, %s26
      %s33 = sor.u32 %s31, %s32
      %p34 = scmp.eq.s32.totalorder %s33, 0
      %s36 = sadd.s32 %s35, 1
      %s37 = scalar_select %p34, %s35, %s36
      %p40 = pneg %p34
      %p41 = scmp.eq.s32.totalorder %s11, 3
      %p42 = por %p40, %p41
      %p43 = scmp.ne.s32.totalorder %s35, %s38
      %p44 = scmp.eq.s32.totalorder %s11, 0
      %p45 = por %p43, %p44
      %p46 = scmp.ne.s32.totalorder %s35, %s38
      %p47 = scmp.eq.s32.totalorder %s16, 3
      %p48 = por %p46, %p47
      %p49 = scmp.ne.s32.totalorder %s38, %s39
      %p50 = scmp.eq.s32.totalorder %s16, 0
      %p51 = por %p49, %p50
      %p52 = scmp.ne.s32.totalorder %s38, %s39
      %p53 = scmp.eq.s32.totalorder %s17, 3
      %p54 = por %p52, %p53
      %p56 = scmp.ne.s32.totalorder %s39, %s55
      %p57 = scmp.eq.s32.totalorder %s17, 0
      %p58 = por %p56, %p57
      %s60 = sadd.s32 %s59, 1
      %p63 = scmp.eq.s32.totalorder %s11, 3
      %p64 = scmp.ne.s32.totalorder %s59, %s61
      %p65 = scmp.eq.s32.totalorder %s11, 0
      %p66 = por %p64, %p65
      %p67 = scmp.ne.s32.totalorder %s59, %s61
      %p68 = scmp.eq.s32.totalorder %s16, 3
      %p69 = por %p67, %p68
      %p70 = scmp.ne.s32.totalorder %s61, %s62
      %p71 = scmp.eq.s32.totalorder %s16, 0
      %p72 = por %p70, %p71
      %p73 = scmp.ne.s32.totalorder %s61, %s62
      %p74 = scmp.eq.s32.totalorder %s17, 3
      %p75 = por %p73, %p74
      %p77 = scmp.ne.s32.totalorder %s62, %s76
      %p78 = scmp.eq.s32.totalorder %s17, 0
      %p79 = por %p77, %p78
      %s80 = ssub.s32 %s18, %s30
      %p81 = scmp.eq.s32.totalorder %s80, 0
      %s83 = sadd.s32 %s82, 1
      %s84 = scalar_select %p81, %s82, %s83
      %p87 = pneg %p81
      %p88 = scmp.eq.s32.totalorder %s11, 3
      %p89 = por %p87, %p88
      %p90 = scmp.ne.s32.totalorder %s82, %s85
      %p91 = scmp.eq.s32.totalorder %s11, 0
      %p92 = por %p90, %p91
      %p93 = scmp.ne.s32.totalorder %s82, %s85
      %p94 = scmp.eq.s32.totalorder %s16, 3
      %p95 = por %p93, %p94
      %p96 = scmp.ne.s32.totalorder %s85, %s86
      %p97 = scmp.eq.s32.totalorder %s16, 0
      %p98 = por %p96, %p97
      %p99 = scmp.ne.s32.totalorder %s85, %s86
      %p100 = scmp.eq.s32.totalorder %s17, 3
      %p101 = por %p99, %p100
      %p103 = scmp.ne.s32.totalorder %s86, %s102
      %p104 = scmp.eq.s32.totalorder %s17, 0
      %p105 = por %p103, %p104
      %p106 = scmp.le.s32.totalorder 1, %s11
      %p107 = scmp.lt.s32.totalorder %s11, 5
      %p108 = pnand %p106, %p107
      %p109 = pneg %p108
      // Predicated region
      $region9: #{tpu_custom_call.1} parent=5 // pred_check
        _
      $region10: #{tpu_custom_call.1} parent=5 // pred_check_branch
        %111 = sbr.rel (%p108) target = $region12
      $region11: #{tpu_custom_call.1} parent=5 // pred_region
        %s112 = ssub.s32 %s11, 1
        // Predicated region
        $region13: #{tpu_custom_call.1} parent=11 // pred_check
          %p113 = pneg %p72
        $region14: #{tpu_custom_call.1} parent=11 // pred_check_branch
          %115 = sbr.rel (%p113) target = $region16
        $region15: #{tpu_custom_call.1} parent=11 // pred_region
          _
        $region16: #{tpu_custom_call.1} parent=11 // pred_fallthru
          _
      $region12: #{tpu_custom_call.1} parent=5 // pred_fallthru
        _
      %p116 = scmp.lt.s32.totalorder %s11, 4
      // Predicated region
      $region17: #{tpu_custom_call.1} parent=5 // pred_check
        %p117 = pneg %p116
      $region18: #{tpu_custom_call.1} parent=5 // pred_check_branch
        %119 = sbr.rel (%p117) target = $region20
      $region19: #{tpu_custom_call.1} parent=5 // pred_region
        // Predicated region
        $region21: #{tpu_custom_call.1} parent=19 // pred_check
          %p120 = pneg %p45
        $region22: #{tpu_custom_call.1} parent=19 // pred_check_branch
          %122 = sbr.rel (%p120) target = $region24
        $region23: #{tpu_custom_call.1} parent=19 // pred_region
          %s123 = sand.u32 %s35, 1
          %s124 = scalar_lea.sflag [#allocation5], %s123
          %s125 = sand.u32 %s35, 1
          %s126 = smul.addr %s125, 4
          %s127 = scalar_lea.vmem [#allocation4], %s126
          %s129 = ssub.s32 64, 64
          %130 = vsyncadd %s124, %s129
          %s131 = smul.addr %s18, 2
          %s132 = sadd.s32 %s19, %s131
          %s133 = smul.addr %s132, 64
          %s134 = scalar_lea.hbm %s0, %s133
          %s136 = sshll.u32 %s127, 4
          %s137 = int_to_ptr.vmem [resolvable:$true] %s136
          %139 = dma.hbm_to_vmem [thread:$0]  %s134, 64, %s137, %s124
        $region24: #{tpu_custom_call.1} parent=19 // pred_fallthru
          _
      $region20: #{tpu_custom_call.1} parent=5 // pred_fallthru
        _
      %p140 = scmp.le.s32.totalorder 1, %s11
      %p141 = scmp.lt.s32.totalorder %s11, 5
      %p142 = pnand %p140, %p141
      %p143 = pneg %p142
      // Predicated region
      $region25: #{tpu_custom_call.1} parent=5 // pred_check
        _
      $region26: #{tpu_custom_call.1} parent=5 // pred_check_branch
        %145 = sbr.rel (%p142) target = $region28
      $region27: #{tpu_custom_call.1} parent=5 // pred_region
        %s146 = ssub.s32 %s11, 1
        %s147 = sand.u32 %s38, 1
        %s148 = scalar_lea.sflag [#allocation5], %s147
        %s149 = sand.u32 %s38, 1
        %s150 = smul.addr %s149, 4
        %s151 = scalar_lea.vmem [#allocation4], %s150
        // Predicated region
        $region29: #{tpu_custom_call.1} parent=27 // pred_check
          %p152 = pneg %p51
        $region30: #{tpu_custom_call.1} parent=27 // pred_check_branch
          %154 = sbr.rel (%p152) target = $region32
        $region31: #{tpu_custom_call.1} parent=27 // pred_region
          %155 = dma.done %s148, 64
        $region32: #{tpu_custom_call.1} parent=27 // pred_fallthru
          _
        %s156 = sand.u32 %s38, 1
        %s157 = scalar_lea.sflag [#allocation5], %s156
        %s158 = sand.u32 %s38, 1
        %s159 = smul.addr %s158, 4
        %s160 = scalar_lea.vmem [#allocation4], %s159
        %p161 = pneg %p51
        %p162 = pneg %p48
        %p163 = pneg %p72
        %p164 = pneg %p69
        %p165 = pneg %p98
        %p166 = pneg %p95
        %p167 = scmp.lt.s32.totalorder %s20, 1
        %s168 = scalar_select %p167, %s20, 1
        %s169 = smul.addr %s168, 8
        %s170 = scalar_lea.vmem %s2, %s169
        %p171 = scmp.lt.s32.totalorder %s20, 1
        %s172 = scalar_select %p171, %s20, 1
        %s173 = smul.addr %s172, 8
        %s174 = scalar_lea.vmem %s2, %s173
        %p175 = scmp.eq.s32.totalorder %s21, 0
        // Predicated region
        $region33: #{tpu_custom_call.1} parent=27 // pred_check
          %p176 = pneg %p175
        $region34: #{tpu_custom_call.1} parent=27 // pred_check_branch
          %178 = sbr.rel (%p176) target = $region36
        $region35: #{tpu_custom_call.1} parent=27 // pred_region
          %vm179 = vcmask 7168
          %180 = vst.msk [vmem:[#allocation2] sm:$0xff] %vm179, 0.0
          %181 = vst.msk [vmem:[#allocation3] sm:$0xff] %vm179, 0.0
        $region36: #{tpu_custom_call.1} parent=27 // pred_fallthru
          _
        %v182 = vld [vmem:[%s151] sm:$0xf]
        %v183 = vld [vmem:[%s1] sm:$0xff]
        %vm184 = vcmask 31744
        %v186 = vsel %vm184, %v183, 0
        %vm188 = vcmask 1043456
        %v190 = vsel %vm188, %v182, 0
        %192 = vmatprep.subr.mxu0 0.0
        %193 = vmatpush1.msra.mxu0 %v190
        %194 = vmatprep.subr.mxu0 0.0
        %195 = vmatpush1.msra.mxu0 0.0
        %196 = vmatprep.subr.mxu0 0.0
        %197 = vmatpush1.msra.mxu0 0.0
        %198 = vmatprep.subr.mxu0 0.0
        %199 = vmatpush1.msra.mxu0 0.0
        %200 = vmatprep.subr.mxu0 0.0
        %201 = vmatpush1.msra.mxu0 0.0
        %202 = vmatprep.subr.mxu0 0.0
        %203 = vmatpush1.msra.mxu0 0.0
        %204 = vmatprep.subr.mxu0 0.0
        %205 = vmatpush1.msra.mxu0 0.0
        %206 = vmatprep.subr.mxu0 0.0
        %207 = vmatpush1.msra.mxu0 0.0
        %208 = vmatprep.subr.mxu0 0.0
        %209 = vmatpush1.msra.mxu0 0.0
        %210 = vmatprep.subr.mxu0 0.0
        %211 = vmatpush1.msra.mxu0 0.0
        %212 = vmatprep.subr.mxu0 0.0
        %213 = vmatpush1.msra.mxu0 0.0
        %214 = vmatprep.subr.mxu0 0.0
        %215 = vmatpush1.msra.mxu0 0.0
        %216 = vmatprep.subr.mxu0 0.0
        %217 = vmatpush1.msra.mxu0 0.0
        %218 = vmatprep.subr.mxu0 0.0
        %219 = vmatpush1.msra.mxu0 0.0
        %220 = vmatprep.subr.mxu0 0.0
        %221 = vmatpush1.msra.mxu0 0.0
        %222 = vmatprep.subr.mxu0 0.0
        %223 = vmatpush1.msra.mxu0 0.0
        %224 = vmatprep.subr.mxu0 0.0
        %225 = vmatpush1.msra.mxu0 0.0
        %226 = vmatprep.subr.mxu0 0.0
        %227 = vmatpush1.msra.mxu0 0.0
        %228 = vmatprep.subr.mxu0 0.0
        %229 = vmatpush1.msra.mxu0 0.0
        %230 = vmatprep.subr.mxu0 0.0
        %231 = vmatpush1.msra.mxu0 0.0
        %232 = vmatprep.subr.mxu0 0.0
        %233 = vmatpush1.msra.mxu0 0.0
        %234 = vmatprep.subr.mxu0 0.0
        %235 = vmatpush1.msra.mxu0 0.0
        %236 = vmatprep.subr.mxu0 0.0
        %237 = vmatpush1.msra.mxu0 0.0
        %238 = vmatprep.subr.mxu0 0.0
        %239 = vmatpush1.msra.mxu0 0.0
        %240 = vmatprep.subr.mxu0 0.0
        %241 = vmatpush1.msra.mxu0 0.0
        %242 = vmatprep.subr.mxu0 0.0
        %243 = vmatpush1.msra.mxu0 0.0
        %244 = vmatprep.subr.mxu0 0.0
        %245 = vmatpush1.msra.mxu0 0.0
        %246 = vmatprep.subr.mxu0 0.0
        %247 = vmatpush1.msra.mxu0 0.0
        %248 = vmatprep.subr.mxu0 0.0
        %249 = vmatpush1.msra.mxu0 0.0
        %250 = vmatprep.subr.mxu0 0.0
        %251 = vmatpush1.msra.mxu0 0.0
        %252 = vmatprep.subr.mxu0 0.0
        %253 = vmatpush1.msra.mxu0 0.0
        %254 = vmatprep.subr.mxu0 0.0
        %255 = vmatpush1.msra.mxu0 0.0
        %256 = vmatprep.mubr.f32.mxu0 0.0
        %257 = vmatmul.mubr.f32.gmra.mrb[0].mxu0 %v186
        %v258 = vpop.f32.mrb[0].mxu0
        %v259 = vadd.f32 0.0, %v258
        %v260 = vpop.f32.mrb[0].mxu0
        %261 = vdwg.mxu0
        %v262 = vld [vmem:[#allocation2] sm:$0xff]
        %263 = vadd.xlane.f32.xlu0 %v259
        %v264 = vpop.xlane.xlu0 %263
        %v265 = vadd.f32 %v262, %v264
        %vm266 = vcmask 7168
        %267 = vst.msk [vmem:[#allocation2] sm:$0xff] %vm266, %v265
        %v268 = vld [vmem:[#allocation3] sm:$0xff]
        %v269 = vmul.f32 %v259, %v259
        %270 = vadd.xlane.f32.xlu0 %v269
        %v271 = vpop.xlane.xlu0 %270
        %v272 = vadd.f32 %v268, %v271
        %273 = vst.msk [vmem:[#allocation3] sm:$0xff] %vm266, %v272
        %p274 = scmp.eq.s32.totalorder %s21, 1
        // Predicated region
        $region37: #{tpu_custom_call.1} parent=27 // pred_check
          %p275 = pneg %p274
        $region38: #{tpu_custom_call.1} parent=27 // pred_check_branch
          %277 = sbr.rel (%p275) target = $region40
        $region39: #{tpu_custom_call.1} parent=27 // pred_region
          %v278 = vld [vmem:[#allocation2] sm:$0xff]
          %v279 = vmul.f32 %v278, 0.00390625
          %v280 = vld [vmem:[#allocation3] sm:$0xff]
          %v281 = vmul.f32 %v280, 0.00390625
          %v282 = vmul.f32 %v279, %v279
          %v283 = vsub.f32 %v281, %v282
          %v284 = vmax.f32 %v283, 0.0
          %v285 = vadd.f32 %v284, 1e-05
          %v286 = vrsqrt.pop %v285
          %287 = vst.msk [vmem:[%s174] sm:$0xff] %vm266, %v279
          %289 = vrot.lane.b32.xlu0 %v286, 1
          %v290 = vpop.permute.xlu0 %289
          %vm292 = vcmask 15368
          %293 = vst.msk [vmem:[%s174] sm:$0xff] %vm292, %v290
        $region40: #{tpu_custom_call.1} parent=27 // pred_fallthru
          _
        %p294 = scmp.lt.s32.totalorder %s20, 1
        %s295 = scalar_select %p294, %s20, 1
        %s296 = smul.addr %s295, 8
        %s297 = scalar_lea.vmem %s2, %s296
        // Predicated region
        $region41: #{tpu_custom_call.1} parent=27 // pred_check
          %p298 = pneg %p95
        $region42: #{tpu_custom_call.1} parent=27 // pred_check_branch
          %300 = sbr.rel (%p298) target = $region44
        $region43: #{tpu_custom_call.1} parent=27 // pred_region
          _
        $region44: #{tpu_custom_call.1} parent=27 // pred_fallthru
          _
      $region28: #{tpu_custom_call.1} parent=5 // pred_fallthru
        _
      %p301 = scmp.le.s32.totalorder 2, %s11
      // Predicated region
      $region45: #{tpu_custom_call.1} parent=5 // pred_check
        %p302 = pneg %p301
      $region46: #{tpu_custom_call.1} parent=5 // pred_check_branch
        %304 = sbr.rel (%p302) target = $region48
      $region47: #{tpu_custom_call.1} parent=5 // pred_region
        %s305 = ssub.s32 %s11, 2
        // Predicated region
        $region49: #{tpu_custom_call.1} parent=47 // pred_check
          %p306 = pneg %p101
        $region50: #{tpu_custom_call.1} parent=47 // pred_check_branch
          %308 = sbr.rel (%p306) target = $region52
        $region51: #{tpu_custom_call.1} parent=47 // pred_region
          %p309 = scmp.lt.s32.totalorder %s22, 1
          %s310 = scalar_select %p309, %s22, 1
          %s311 = smul.addr %s310, 8
          %s312 = scalar_lea.vmem %s2, %s311
        $region52: #{tpu_custom_call.1} parent=47 // pred_fallthru
          _
      $region48: #{tpu_custom_call.1} parent=5 // pred_fallthru
        _
    $region6: #{tpu_custom_call.1} parent=1 // loop_footer
      %s15 = sadd.s32 1, %s11
    $region7: #{tpu_custom_call.1} parent=1 // loop_footer_branch
      %10 = sbr.rel target = $region3
    $region8: #{tpu_custom_call.1} parent=1 // loop_exit
      _
    %313 = vsyncpa [#allocation5], 1
    %s314 = scalar_lea.sflag [#allocation5], 1
    %315 = vsyncpa %s314, 1

</llo_original>
